<compile_context>
chip_gen: v5e
topology: v5e:2x2
jax: 0.10.0
libtpu: 0.0.40
codegen_flags: <defaults>
</compile_context>

<pallas_src>
import functools
import math

import jax
import jax.numpy as jnp
from jax import lax
from jax.experimental import pallas as pl
from jax.experimental.pallas import tpu as pltpu


def _mha_kernel(x_ref, wqkv_ref, wout_ref, o_ref, *, num_heads, head_dim):
    """One batch element per grid step.

    x_ref    : (1, S, D)  activations (f32 or bf16)
    wqkv_ref : (D, 3D)    fused QKV weights, 1/sqrt(hd) pre-folded into the Q columns
    wout_ref : (D, D)     output projection weights (in, out layout)
    o_ref    : (1, S, D)  output
    """
    x = x_ref[0]                                   # (S, D)
    cdt = x.dtype                                  # MXU operand dtype (f32 or bf16)
    d_model = num_heads * head_dim

    # Single lane-dense fused QKV projection (one MXU contraction, f32 accumulate).
    qkv = jnp.dot(x, wqkv_ref[...],
                  preferred_element_type=jnp.float32)            # (S, 3D) f32
    qkv = qkv.astype(cdt)

    # TODO(synk): optional attention_mask (masked_fill -1e9) path not wired in;
    # only the reference default (mask=None) is implemented.
    head_outs = []
    for h in range(num_heads):
        lo = h * head_dim
        q_h = qkv[:, lo:lo + head_dim]                              # (S, hd)
        k_h = qkv[:, d_model + lo:d_model + lo + head_dim]          # (S, hd)
        v_h = qkv[:, 2 * d_model + lo:2 * d_model + lo + head_dim]  # (S, hd)

        # scores = q_h @ k_h.T without materializing a transpose
        # (contract dim 1 of both operands; MXU consumes K untransposed).
        s = lax.dot_general(q_h, k_h,
                            dimension_numbers=(((1,), (1,)), ((), ())),
                            preferred_element_type=jnp.float32)    # (S, S)

        # Softmax strictly in f32 (scale already folded into the Q weights).
        s = s - jnp.max(s, axis=-1, keepdims=True)
        p = jnp.exp(s)
        p = p * pl.reciprocal(jnp.sum(p, axis=-1, keepdims=True), approx=True)

        # Per-head attention output stays (S, hd): O(S^2 * hd) MXU work per head,
        # not O(S^2 * D) (w_o is NOT folded into V).
        head_outs.append(jnp.dot(p.astype(cdt), v_h,
                                 preferred_element_type=jnp.float32))  # (S, hd) f32

    # Head concat along lanes (cheap at these widths), then ONE output projection.
    attn = jnp.concatenate(head_outs, axis=-1).astype(cdt)             # (S, D)
    out = jnp.dot(attn, wout_ref[...], preferred_element_type=jnp.float32)
    o_ref[0] = out.astype(o_ref.dtype)


def standard_attention(x, w_qkv, w_out, num_heads, *, compute_dtype=None):
    """x: (B, S, D); w_qkv: (D, 3D) (in, out); w_out: (D, D) (in, out).

    compute_dtype: optional MXU operand dtype (e.g. jnp.bfloat16) for v6e/v7x;
    softmax and all accumulations stay f32; output is returned in x's original dtype.
    """
    B, S, D = x.shape
    hd = D // num_heads
    out_dtype = x.dtype
    scale = 1.0 / math.sqrt(hd)

    # Host/XLA-side weight prep: fold the softmax scale into the Q columns of the
    # fused (D, 3D) QKV weight (one-time layout plumbing, not kernel work).
    w_qkv_f = jnp.concatenate([w_qkv[:, :D] * scale, w_qkv[:, D:]], axis=-1)   # (D, 3D)

    if compute_dtype is not None:
        x = x.astype(compute_dtype)
        w_qkv_f = w_qkv_f.astype(compute_dtype)
        w_out = w_out.astype(compute_dtype)

    kernel = functools.partial(_mha_kernel, num_heads=num_heads, head_dim=hd)

    # Grid over batch: shards work across v7x's two TensorCores ("parallel");
    # weight block indices are constant so weights stay resident (no re-DMA).
    # TODO(synk): for large S/D add a flash-style q-tile/kv-tile grid sized against
    # v7x's 64 MiB physical / 32 MiB default-scoped VMEM (set vmem_limit_bytes
    # explicitly and account for 2x double-buffering); not needed at these shapes.
    return pl.pallas_call(
        kernel,
        grid=(B,),
        out_shape=jax.ShapeDtypeStruct((B, S, D), out_dtype),
        in_specs=[
            pl.BlockSpec((1, S, D), lambda b: (b, 0, 0)),   # x: one batch row per step
            pl.BlockSpec((D, 3 * D), lambda b: (0, 0)),     # fused QKV weight (resident)
            pl.BlockSpec((D, D), lambda b: (0, 0)),         # output projection (resident)
        ],
        out_specs=pl.BlockSpec((1, S, D), lambda b: (b, 0, 0)),
        compiler_params=pltpu.CompilerParams(
            dimension_semantics=("parallel",)),
    )(x, w_qkv_f, w_out)


def standard_attention_ref(x, w_qkv, w_out, num_heads):
    """Pure-JAX reference mirroring the PyTorch forward (mask=None)."""
    B, S, D = x.shape
    hd = D // num_heads
    qkv = x @ w_qkv
    q, k, v = jnp.split(qkv, 3, axis=-1)
    q = q.reshape(B, S, num_heads, hd).transpose(0, 2, 1, 3)
    k = k.reshape(B, S, num_heads, hd).transpose(0, 2, 1, 3)
    v = v.reshape(B, S, num_heads, hd).transpose(0, 2, 1, 3)
    scores = jnp.einsum("bhqd,bhkd->bhqk", q, k) / math.sqrt(hd)
    probs = jax.nn.softmax(scores, axis=-1)
    out = jnp.einsum("bhqk,bhkd->bhqd", probs, v)
    out = out.transpose(0, 2, 1, 3).reshape(B, S, D)
    return out @ w_out


if __name__ == "__main__":
    # Small shapes consistent with the module: batch=2, seq=8, model_dim=32, heads=4.
    B, S, D, H = 2, 8, 32, 4

    key = jax.random.PRNGKey(0)
    kx, kq, ko = jax.random.split(key, 3)

    x = jax.random.normal(kx, (B, S, D), dtype=jnp.float32)

    # nn.Linear(model_dim, 3*model_dim, bias=False): weight shape (3D, D).
    # Store the transposed (in, out) layout so the math is y = x @ W.
    w_qkv_pt = jax.random.normal(kq, (3 * D, D), dtype=jnp.float32) * (1.0 / math.sqrt(D))
    w_out_pt = jax.random.normal(ko, (D, D), dtype=jnp.float32) * (1.0 / math.sqrt(D))
    w_qkv = w_qkv_pt.T   # (D, 3D)
    w_out = w_out_pt.T   # (D, D)

    ref = standard_attention_ref(x, w_qkv, w_out, H)

    # f32 path (default; recommended on v5e). Tolerance covers the EUP approximate
    # reciprocal in the softmax denominator.
    out = jax.block_until_ready(standard_attention(x, w_qkv, w_out, H))
    assert out.shape == (B, S, D)
    assert jnp.allclose(out, ref, atol=2e-2, rtol=2e-2), "f32 mismatch vs reference"

    # bf16 MXU operand path (v6e/v7x): bf16 matmul operands, f32 softmax/accumulation.
    out_bf16 = jax.block_until_ready(
        standard_attention(x, w_qkv, w_out, H, compute_dtype=jnp.bfloat16))
    assert out_bf16.shape == (B, S, D)
    assert jnp.allclose(out_bf16, ref, atol=1e-1, rtol=1e-1), "bf16 mismatch vs reference"

    print("KERNEL_OK")
</pallas_src>

<mosaic_0001>
module attributes {stable_mosaic.version = 11 : i64} {
  func.func @_mha_kernel(%arg0: i32, %arg1: memref<1x8x32xf32, #tpu.memory_space<vmem>>, %arg2: memref<32x96xf32, #tpu.memory_space<vmem>>, %arg3: memref<32x32xf32, #tpu.memory_space<vmem>>, %arg4: memref<1x8x32xf32, #tpu.memory_space<vmem>>) attributes {dimension_semantics = [#tpu.dimension_semantics<parallel>], iteration_bounds = array<i64: 2>, scalar_prefetch = 0 : i64, scratch_operands = 0 : i64, tpu.core_type = #tpu.core_type<tc>, window_params = [{transform_indices = @transform_0, window_bounds = array<i64: 1, 8, 32>}, {pipeline_mode = #tpu.pipeline_mode<synchronous>, transform_indices = @transform_1, window_bounds = array<i64: 32, 96>}, {pipeline_mode = #tpu.pipeline_mode<synchronous>, transform_indices = @transform_2, window_bounds = array<i64: 32, 32>}, {transform_indices = @transform_3, window_bounds = array<i64: 1, 8, 32>}]} {
    %c0 = arith.constant 0 : index
    %c0_0 = arith.constant 0 : index
    %c0_1 = arith.constant 0 : index
    %0 = vector.load %arg1[%c0, %c0_0, %c0_1] : memref<1x8x32xf32, #tpu.memory_space<vmem>>, vector<1x8x32xf32>
    %1 = vector.shape_cast %0 : vector<1x8x32xf32> to vector<8x32xf32>
    %c0_2 = arith.constant 0 : index
    %c0_3 = arith.constant 0 : index
    %2 = vector.load %arg2[%c0_2, %c0_3] : memref<32x96xf32, #tpu.memory_space<vmem>>, vector<32x96xf32>
    %cst = arith.constant dense<0.000000e+00> : vector<8x96xf32>
    %3 = tpu.matmul %1, %2, %cst {dimension_numbers = #tpu.dot_dimension_numbers<[1], [0], [0], [1], [0, 0, 1, 1], [], []>} : vector<8x32xf32>, vector<32x96xf32>, vector<8x96xf32> -> vector<8x96xf32>
    %4 = vector.extract_strided_slice %3 {offsets = [0, 0], sizes = [8, 8], strides = [1, 1]} : vector<8x96xf32> to vector<8x8xf32>
    %5 = vector.extract_strided_slice %3 {offsets = [0, 32], sizes = [8, 8], strides = [1, 1]} : vector<8x96xf32> to vector<8x8xf32>
    %6 = vector.extract_strided_slice %3 {offsets = [0, 64], sizes = [8, 8], strides = [1, 1]} : vector<8x96xf32> to vector<8x8xf32>
    %cst_4 = arith.constant dense<0.000000e+00> : vector<8x8xf32>
    %7 = tpu.matmul %4, %5, %cst_4 {dimension_numbers = #tpu.dot_dimension_numbers<[1], [1], [0], [0], [0, 0, 1, 0], [], []>} : vector<8x8xf32>, vector<8x8xf32>, vector<8x8xf32> -> vector<8x8xf32>
    %cst_5 = arith.constant dense<0xFF800000> : vector<8xf32>
    %8 = vector.multi_reduction <maximumf>, %7, %cst_5 [1] : vector<8x8xf32> to vector<8xf32>
    %9 = vector.shape_cast %8 : vector<8xf32> to vector<8x1xf32>
    %10 = vector.broadcast %9 : vector<8x1xf32> to vector<8x8xf32>
    %11 = arith.subf %7, %10 : vector<8x8xf32>
    %12 = math.exp %11 : vector<8x8xf32>
    %cst_6 = arith.constant dense<0.000000e+00> : vector<8xf32>
    %13 = vector.multi_reduction <add>, %12, %cst_6 [1] : vector<8x8xf32> to vector<8xf32>
    %14 = vector.shape_cast %13 : vector<8xf32> to vector<8x1xf32>
    %15 = tpu.reciprocal %14 {approx = true} : vector<8x1xf32> -> vector<8x1xf32>
    %16 = vector.broadcast %15 : vector<8x1xf32> to vector<8x8xf32>
    %17 = arith.mulf %12, %16 : vector<8x8xf32>
    %cst_7 = arith.constant dense<0.000000e+00> : vector<8x8xf32>
    %18 = tpu.matmul %17, %6, %cst_7 {dimension_numbers = #tpu.dot_dimension_numbers<[1], [0], [0], [1], [0, 0, 1, 1], [], []>} : vector<8x8xf32>, vector<8x8xf32>, vector<8x8xf32> -> vector<8x8xf32>
    %19 = vector.extract_strided_slice %3 {offsets = [0, 8], sizes = [8, 8], strides = [1, 1]} : vector<8x96xf32> to vector<8x8xf32>
    %20 = vector.extract_strided_slice %3 {offsets = [0, 40], sizes = [8, 8], strides = [1, 1]} : vector<8x96xf32> to vector<8x8xf32>
    %21 = vector.extract_strided_slice %3 {offsets = [0, 72], sizes = [8, 8], strides = [1, 1]} : vector<8x96xf32> to vector<8x8xf32>
    %cst_8 = arith.constant dense<0.000000e+00> : vector<8x8xf32>
    %22 = tpu.matmul %19, %20, %cst_8 {dimension_numbers = #tpu.dot_dimension_numbers<[1], [1], [0], [0], [0, 0, 1, 0], [], []>} : vector<8x8xf32>, vector<8x8xf32>, vector<8x8xf32> -> vector<8x8xf32>
    %cst_9 = arith.constant dense<0xFF800000> : vector<8xf32>
    %23 = vector.multi_reduction <maximumf>, %22, %cst_9 [1] : vector<8x8xf32> to vector<8xf32>
    %24 = vector.shape_cast %23 : vector<8xf32> to vector<8x1xf32>
    %25 = vector.broadcast %24 : vector<8x1xf32> to vector<8x8xf32>
    %26 = arith.subf %22, %25 : vector<8x8xf32>
    %27 = math.exp %26 : vector<8x8xf32>
    %cst_10 = arith.constant dense<0.000000e+00> : vector<8xf32>
    %28 = vector.multi_reduction <add>, %27, %cst_10 [1] : vector<8x8xf32> to vector<8xf32>
    %29 = vector.shape_cast %28 : vector<8xf32> to vector<8x1xf32>
    %30 = tpu.reciprocal %29 {approx = true} : vector<8x1xf32> -> vector<8x1xf32>
    %31 = vector.broadcast %30 : vector<8x1xf32> to vector<8x8xf32>
    %32 = arith.mulf %27, %31 : vector<8x8xf32>
    %cst_11 = arith.constant dense<0.000000e+00> : vector<8x8xf32>
    %33 = tpu.matmul %32, %21, %cst_11 {dimension_numbers = #tpu.dot_dimension_numbers<[1], [0], [0], [1], [0, 0, 1, 1], [], []>} : vector<8x8xf32>, vector<8x8xf32>, vector<8x8xf32> -> vector<8x8xf32>
    %34 = vector.extract_strided_slice %3 {offsets = [0, 16], sizes = [8, 8], strides = [1, 1]} : vector<8x96xf32> to vector<8x8xf32>
    %35 = vector.extract_strided_slice %3 {offsets = [0, 48], sizes = [8, 8], strides = [1, 1]} : vector<8x96xf32> to vector<8x8xf32>
    %36 = vector.extract_strided_slice %3 {offsets = [0, 80], sizes = [8, 8], strides = [1, 1]} : vector<8x96xf32> to vector<8x8xf32>
    %cst_12 = arith.constant dense<0.000000e+00> : vector<8x8xf32>
    %37 = tpu.matmul %34, %35, %cst_12 {dimension_numbers = #tpu.dot_dimension_numbers<[1], [1], [0], [0], [0, 0, 1, 0], [], []>} : vector<8x8xf32>, vector<8x8xf32>, vector<8x8xf32> -> vector<8x8xf32>
    %cst_13 = arith.constant dense<0xFF800000> : vector<8xf32>
    %38 = vector.multi_reduction <maximumf>, %37, %cst_13 [1] : vector<8x8xf32> to vector<8xf32>
    %39 = vector.shape_cast %38 : vector<8xf32> to vector<8x1xf32>
    %40 = vector.broadcast %39 : vector<8x1xf32> to vector<8x8xf32>
    %41 = arith.subf %37, %40 : vector<8x8xf32>
    %42 = math.exp %41 : vector<8x8xf32>
    %cst_14 = arith.constant dense<0.000000e+00> : vector<8xf32>
    %43 = vector.multi_reduction <add>, %42, %cst_14 [1] : vector<8x8xf32> to vector<8xf32>
    %44 = vector.shape_cast %43 : vector<8xf32> to vector<8x1xf32>
    %45 = tpu.reciprocal %44 {approx = true} : vector<8x1xf32> -> vector<8x1xf32>
    %46 = vector.broadcast %45 : vector<8x1xf32> to vector<8x8xf32>
    %47 = arith.mulf %42, %46 : vector<8x8xf32>
    %cst_15 = arith.constant dense<0.000000e+00> : vector<8x8xf32>
    %48 = tpu.matmul %47, %36, %cst_15 {dimension_numbers = #tpu.dot_dimension_numbers<[1], [0], [0], [1], [0, 0, 1, 1], [], []>} : vector<8x8xf32>, vector<8x8xf32>, vector<8x8xf32> -> vector<8x8xf32>
    %49 = vector.extract_strided_slice %3 {offsets = [0, 24], sizes = [8, 8], strides = [1, 1]} : vector<8x96xf32> to vector<8x8xf32>
    %50 = vector.extract_strided_slice %3 {offsets = [0, 56], sizes = [8, 8], strides = [1, 1]} : vector<8x96xf32> to vector<8x8xf32>
    %51 = vector.extract_strided_slice %3 {offsets = [0, 88], sizes = [8, 8], strides = [1, 1]} : vector<8x96xf32> to vector<8x8xf32>
    %cst_16 = arith.constant dense<0.000000e+00> : vector<8x8xf32>
    %52 = tpu.matmul %49, %50, %cst_16 {dimension_numbers = #tpu.dot_dimension_numbers<[1], [1], [0], [0], [0, 0, 1, 0], [], []>} : vector<8x8xf32>, vector<8x8xf32>, vector<8x8xf32> -> vector<8x8xf32>
    %cst_17 = arith.constant dense<0xFF800000> : vector<8xf32>
    %53 = vector.multi_reduction <maximumf>, %52, %cst_17 [1] : vector<8x8xf32> to vector<8xf32>
    %54 = vector.shape_cast %53 : vector<8xf32> to vector<8x1xf32>
    %55 = vector.broadcast %54 : vector<8x1xf32> to vector<8x8xf32>
    %56 = arith.subf %52, %55 : vector<8x8xf32>
    %57 = math.exp %56 : vector<8x8xf32>
    %cst_18 = arith.constant dense<0.000000e+00> : vector<8xf32>
    %58 = vector.multi_reduction <add>, %57, %cst_18 [1] : vector<8x8xf32> to vector<8xf32>
    %59 = vector.shape_cast %58 : vector<8xf32> to vector<8x1xf32>
    %60 = tpu.reciprocal %59 {approx = true} : vector<8x1xf32> -> vector<8x1xf32>
    %61 = vector.broadcast %60 : vector<8x1xf32> to vector<8x8xf32>
    %62 = arith.mulf %57, %61 : vector<8x8xf32>
    %cst_19 = arith.constant dense<0.000000e+00> : vector<8x8xf32>
    %63 = tpu.matmul %62, %51, %cst_19 {dimension_numbers = #tpu.dot_dimension_numbers<[1], [0], [0], [1], [0, 0, 1, 1], [], []>} : vector<8x8xf32>, vector<8x8xf32>, vector<8x8xf32> -> vector<8x8xf32>
    %64 = tpu.concatenate %18, %33, %48, %63 in 1 : vector<8x8xf32>, vector<8x8xf32>, vector<8x8xf32>, vector<8x8xf32> -> vector<8x32xf32>
    %c0_20 = arith.constant 0 : index
    %c0_21 = arith.constant 0 : index
    %65 = vector.load %arg3[%c0_20, %c0_21] : memref<32x32xf32, #tpu.memory_space<vmem>>, vector<32x32xf32>
    %cst_22 = arith.constant dense<0.000000e+00> : vector<8x32xf32>
    %66 = tpu.matmul %64, %65, %cst_22 {dimension_numbers = #tpu.dot_dimension_numbers<[1], [0], [0], [1], [0, 0, 1, 1], [], []>} : vector<8x32xf32>, vector<32x32xf32>, vector<8x32xf32> -> vector<8x32xf32>
    %c0_23 = arith.constant 0 : index
    %c0_24 = arith.constant 0 : index
    %c0_25 = arith.constant 0 : index
    %67 = vector.load %arg4[%c0_23, %c0_24, %c0_25] : memref<1x8x32xf32, #tpu.memory_space<vmem>>, vector<1x8x32xf32>
    %68 = vector.shape_cast %67 : vector<1x8x32xf32> to vector<8x32xf32>
    %69 = vector.shape_cast %66 : vector<8x32xf32> to vector<1x8x32xf32>
    tpu.vector_store %arg4[%c0_23, %c0_24, %c0_25], %69 {strides = array<i32>} : memref<1x8x32xf32, #tpu.memory_space<vmem>>, vector<1x8x32xf32>,
    return
  }
  func.func @transform_0(%arg0: i32) -> (i32, i32, i32) {
    %c0_i32 = arith.constant 0 : i32
    %c0_i32_0 = arith.constant 0 : i32
    %c0_i32_1 = arith.constant 0 : i32
    return %arg0, %c0_i32, %c0_i32_0 : i32, i32, i32
  }
  func.func @transform_1(%arg0: i32) -> (i32, i32) {
    %c0_i32 = arith.constant 0 : i32
    %c0_i32_0 = arith.constant 0 : i32
    %c0_i32_1 = arith.constant 0 : i32
    return %c0_i32, %c0_i32_0 : i32, i32
  }
  func.func @transform_2(%arg0: i32) -> (i32, i32) {
    %c0_i32 = arith.constant 0 : i32
    %c0_i32_0 = arith.constant 0 : i32
    %c0_i32_1 = arith.constant 0 : i32
    return %c0_i32, %c0_i32_0 : i32, i32
  }
  func.func @transform_3(%arg0: i32) -> (i32, i32, i32) {
    %c0_i32 = arith.constant 0 : i32
    %c0_i32_0 = arith.constant 0 : i32
    %c0_i32_1 = arith.constant 0 : i32
    return %arg0, %c0_i32, %c0_i32_0 : i32, i32, i32
  }
}

</mosaic_0001>

<llo_original>
// kernel: tpu_custom_call.1
$region0: #{tpu_custom_call.1}
  #allocation0 [shape = 'u32[]', space=smem, size = 0x4, offset = 0x4, fixed_abs, tag = 'smem constant byte address 0x4 - core index']
  #allocation1 [shape = 'u32[72,128]{1,0:T(1,128)}', space=vmem, size = 0x9000, scoped, tag = 'internal scratch']
  %s0 = inlined_call_operand.hbm [shape: f32[2,8,32], index: 0, kind: input, shape index: {}]
  %s1 = inlined_call_operand.hbm [shape: f32[32,96], index: 1, kind: input, shape index: {}]
  %s2 = inlined_call_operand.hbm [shape: f32[32,32], index: 2, kind: input, shape index: {}]
  %s3 = inlined_call_operand.hbm [shape: f32[2,8,32], index: 3, kind: output, shape index: {}]
  %s4 = sld [smem:[#allocation0]]
  $region57: #{tpu_custom_call.1} parent=0
    _
  %s6 = ssub.s32 1, %s4
  %s7 = scalar_select 0, %s6, %s4
  $region1: #{tpu_custom_call.1} parent=0
    #allocation2 [shape = 'u8[8192]{0}', space=vmem, size = 0x2000, scoped, tag = 'input window, operand 0']
    #allocation3 [shape = 's32[2]{0}', space=sflag, size = 0x8, scoped, tag = 'scoped memory for tpu_custom_call.1']
    #allocation4 [shape = 's32[2]{0}', space=sflag, size = 0x8, scoped, tag = 'scoped memory for tpu_custom_call.1']
    #allocation5 [shape = 'u8[16384]{0}', space=vmem, size = 0x4000, scoped, tag = 'input window, operand 1, single buffered']
    #allocation6 [shape = 's32[1]{0}', space=sflag, size = 0x4, scoped, tag = 'scoped memory for tpu_custom_call.1']
    #allocation7 [shape = 'u8[16384]{0}', space=vmem, size = 0x4000, scoped, tag = 'input window, operand 2, single buffered']
    #allocation8 [shape = 'u8[8192]{0}', space=vmem, size = 0x2000, scoped, tag = 'output window, operand 0']
    %8 = vsyncpa [#allocation3], 0
    %s9 = scalar_lea.sflag [#allocation3], 1
    %10 = vsyncpa %s9, 0
    %11 = vsyncpa [#allocation6], 0
    %12 = vsyncpa [#allocation4], 0
    %s13 = scalar_lea.sflag [#allocation4], 1
    %14 = vsyncpa %s13, 0
    loop: start=0, step=1, limit=4
    $region2: #{tpu_custom_call.1} parent=1 // loop_pre_header
      _
    $region3: #{tpu_custom_call.1} parent=1 // loop_header
      %s16 = sphi 0, %s20
      %p17 = scmp.ge.s32.totalorder %s16, 4
      %s26 = sphi 0, %s28
      %s29 = sphi 0, %s26
      %s30 = sphi 0, %s29
      %s46 = sphi 0, %s30
      %s50 = sphi 0, %s50
      %s52 = sphi 0, %s50
      %s53 = sphi 0, %s52
      %s67 = sphi 0, %s53
      %s71 = sphi 0, %s71
      %s73 = sphi 0, %s71
      %s74 = sphi 0, %s73
      %s88 = sphi 0, %s74
      %s94 = sphi 0, %s96
      %s97 = sphi 0, %s94
      %s98 = sphi 0, %s97
      %s114 = sphi 0, %s98
    $region4: #{tpu_custom_call.1} parent=1 // loop_header_branch
      %19 = sbr.rel (%p17) target = $region8
    $region5: #{tpu_custom_call.1} parent=1 // loop_body
      %s21 = ssub.s32 %s16, 1
      %s22 = ssub.s32 %s16, 2
      %s23 = sadd.s32 %s16, 1
      %s24 = ssub.s32 %s16, %s23
      %p25 = scmp.eq.s32.totalorder %s24, 0
      %s27 = sadd.s32 %s26, 1
      %s28 = scalar_select %p25, %s26, %s27
      %p31 = pneg %p25
      %p32 = scmp.eq.s32.totalorder %s16, 1
      %p33 = por %p31, %p32
      %p34 = scmp.ne.s32.totalorder %s26, %s29
      %p35 = scmp.eq.s32.totalorder %s16, 0
      %p36 = por %p34, %p35
      %p37 = scmp.ne.s32.totalorder %s26, %s29
      %p38 = scmp.eq.s32.totalorder %s21, 1
      %p39 = por %p37, %p38
      %p40 = scmp.ne.s32.totalorder %s29, %s30
      %p41 = scmp.eq.s32.totalorder %s21, 0
      %p42 = por %p40, %p41
      %p43 = scmp.ne.s32.totalorder %s29, %s30
      %p44 = scmp.eq.s32.totalorder %s22, 1
      %p45 = por %p43, %p44
      %p47 = scmp.ne.s32.totalorder %s30, %s46
      %p48 = scmp.eq.s32.totalorder %s22, 0
      %p49 = por %p47, %p48
      %s51 = sadd.s32 %s50, 1
      %p54 = scmp.eq.s32.totalorder %s16, 1
      %p55 = scmp.ne.s32.totalorder %s50, %s52
      %p56 = scmp.eq.s32.totalorder %s16, 0
      %p57 = por %p55, %p56
      %p58 = scmp.ne.s32.totalorder %s50, %s52
      %p59 = scmp.eq.s32.totalorder %s21, 1
      %p60 = por %p58, %p59
      %p61 = scmp.ne.s32.totalorder %s52, %s53
      %p62 = scmp.eq.s32.totalorder %s21, 0
      %p63 = por %p61, %p62
      %p64 = scmp.ne.s32.totalorder %s52, %s53
      %p65 = scmp.eq.s32.totalorder %s22, 1
      %p66 = por %p64, %p65
      %p68 = scmp.ne.s32.totalorder %s53, %s67
      %p69 = scmp.eq.s32.totalorder %s22, 0
      %p70 = por %p68, %p69
      %s72 = sadd.s32 %s71, 1
      %p75 = scmp.eq.s32.totalorder %s16, 1
      %p76 = scmp.ne.s32.totalorder %s71, %s73
      %p77 = scmp.eq.s32.totalorder %s16, 0
      %p78 = por %p76, %p77
      %p79 = scmp.ne.s32.totalorder %s71, %s73
      %p80 = scmp.eq.s32.totalorder %s21, 1
      %p81 = por %p79, %p80
      %p82 = scmp.ne.s32.totalorder %s73, %s74
      %p83 = scmp.eq.s32.totalorder %s21, 0
      %p84 = por %p82, %p83
      %p85 = scmp.ne.s32.totalorder %s73, %s74
      %p86 = scmp.eq.s32.totalorder %s22, 1
      %p87 = por %p85, %p86
      %p89 = scmp.ne.s32.totalorder %s74, %s88
      %p90 = scmp.eq.s32.totalorder %s22, 0
      %p91 = por %p89, %p90
      %s92 = ssub.s32 %s16, %s23
      %p93 = scmp.eq.s32.totalorder %s92, 0
      %s95 = sadd.s32 %s94, 1
      %s96 = scalar_select %p93, %s94, %s95
      %p99 = pneg %p93
      %p100 = scmp.eq.s32.totalorder %s16, 1
      %p101 = por %p99, %p100
      %p102 = scmp.ne.s32.totalorder %s94, %s97
      %p103 = scmp.eq.s32.totalorder %s16, 0
      %p104 = por %p102, %p103
      %p105 = scmp.ne.s32.totalorder %s94, %s97
      %p106 = scmp.eq.s32.totalorder %s21, 1
      %p107 = por %p105, %p106
      %p108 = scmp.ne.s32.totalorder %s97, %s98
      %p109 = scmp.eq.s32.totalorder %s21, 0
      %p110 = por %p108, %p109
      %p111 = scmp.ne.s32.totalorder %s97, %s98
      %p112 = scmp.eq.s32.totalorder %s22, 1
      %p113 = por %p111, %p112
      %p115 = scmp.ne.s32.totalorder %s98, %s114
      %p116 = scmp.eq.s32.totalorder %s22, 0
      %p117 = por %p115, %p116
      %p118 = scmp.le.s32.totalorder 1, %s16
      %p119 = scmp.lt.s32.totalorder %s16, 3
      %p120 = pnand %p118, %p119
      %p121 = pneg %p120
      // Predicated region
      $region9: #{tpu_custom_call.1} parent=5 // pred_check
        _
      $region10: #{tpu_custom_call.1} parent=5 // pred_check_branch
        %123 = sbr.rel (%p120) target = $region12
      $region11: #{tpu_custom_call.1} parent=5 // pred_region
        %s124 = ssub.s32 %s16, 1
        // Predicated region
        $region13: #{tpu_custom_call.1} parent=11 // pred_check
          %p125 = pneg %p63
        $region14: #{tpu_custom_call.1} parent=11 // pred_check_branch
          %127 = sbr.rel (%p125) target = $region16
        $region15: #{tpu_custom_call.1} parent=11 // pred_region
          %129 = vsyncadd [#allocation6], 0
          %s130 = sshll.u32 %s1, 4
          %s131 = int_to_ptr.hbm [resolvable:$true] %s130
          %s132 = sshll.u32 [#allocation5], 4
          %s133 = int_to_ptr.vmem [resolvable:$true] %s132
          %138 = dma.hbm_to_vmem [thread:$0]  %s131, 512, %s133, [#allocation6], 128, 128, 8
        $region16: #{tpu_custom_call.1} parent=11 // pred_fallthru
          _
        // Predicated region
        $region17: #{tpu_custom_call.1} parent=11 // pred_check
          %p139 = pneg %p84
        $region18: #{tpu_custom_call.1} parent=11 // pred_check_branch
          %141 = sbr.rel (%p139) target = $region20
        $region19: #{tpu_custom_call.1} parent=11 // pred_region
          %143 = vsyncadd [#allocation6], 0
          %s144 = sshll.u32 %s2, 4
          %s145 = int_to_ptr.hbm [resolvable:$true] %s144
          %s146 = sshll.u32 [#allocation7], 4
          %s147 = int_to_ptr.vmem [resolvable:$true] %s146
          %152 = dma.hbm_to_vmem [thread:$0]  %s145, 512, %s147, [#allocation6], 128, 128, 8
        $region20: #{tpu_custom_call.1} parent=11 // pred_fallthru
          _
      $region12: #{tpu_custom_call.1} parent=5 // pred_fallthru
        _
      %p153 = scmp.lt.s32.totalorder %s16, 2
      // Predicated region
      $region21: #{tpu_custom_call.1} parent=5 // pred_check
        %p154 = pneg %p153
      $region22: #{tpu_custom_call.1} parent=5 // pred_check_branch
        %156 = sbr.rel (%p154) target = $region24
      $region23: #{tpu_custom_call.1} parent=5 // pred_region
        // Predicated region
        $region25: #{tpu_custom_call.1} parent=23 // pred_check
          %p157 = pneg %p36
        $region26: #{tpu_custom_call.1} parent=23 // pred_check_branch
          %159 = sbr.rel (%p157) target = $region28
        $region27: #{tpu_custom_call.1} parent=23 // pred_region
          %s160 = sand.u32 %s26, 1
          %s161 = scalar_lea.sflag [#allocation3], %s160
          %s162 = sand.u32 %s26, 1
          %s163 = smul.addr %s162, 8
          %s164 = scalar_lea.vmem [#allocation2], %s163
          %166 = vsyncadd %s161, 0
          %s167 = smul.addr %s16, 8
          %s168 = scalar_lea.hbm %s0, %s167
          %s170 = sshll.u32 %s168, 4
          %s171 = int_to_ptr.hbm [resolvable:$true] %s170
          %s172 = sshll.u32 %s164, 4
          %s173 = int_to_ptr.vmem [resolvable:$true] %s172
          %175 = dma.hbm_to_vmem [thread:$0]  %s171, 128, %s173, %s161
        $region28: #{tpu_custom_call.1} parent=23 // pred_fallthru
          _
      $region24: #{tpu_custom_call.1} parent=5 // pred_fallthru
        _
      %p176 = scmp.le.s32.totalorder 1, %s16
      %p177 = scmp.lt.s32.totalorder %s16, 3
      %p178 = pnand %p176, %p177
      %p179 = pneg %p178
      // Predicated region
      $region29: #{tpu_custom_call.1} parent=5 // pred_check
        _
      $region30: #{tpu_custom_call.1} parent=5 // pred_check_branch
        %181 = sbr.rel (%p178) target = $region32
      $region31: #{tpu_custom_call.1} parent=5 // pred_region
        %s182 = ssub.s32 %s16, 1
        %s183 = sand.u32 %s29, 1
        %s184 = scalar_lea.sflag [#allocation3], %s183
        %s185 = sand.u32 %s29, 1
        %s186 = smul.addr %s185, 8
        %s187 = scalar_lea.vmem [#allocation2], %s186
        // Predicated region
        $region33: #{tpu_custom_call.1} parent=31 // pred_check
          %p188 = pneg %p42
        $region34: #{tpu_custom_call.1} parent=31 // pred_check_branch
          %190 = sbr.rel (%p188) target = $region36
        $region35: #{tpu_custom_call.1} parent=31 // pred_region
          %192 = dma.done %s184, 128
        $region36: #{tpu_custom_call.1} parent=31 // pred_fallthru
          _
        // Predicated region
        $region37: #{tpu_custom_call.1} parent=31 // pred_check
          %p193 = pneg %p63
        $region38: #{tpu_custom_call.1} parent=31 // pred_check_branch
          %195 = sbr.rel (%p193) target = $region40
        $region39: #{tpu_custom_call.1} parent=31 // pred_region
          %197 = dma.done [#allocation6], 512
        $region40: #{tpu_custom_call.1} parent=31 // pred_fallthru
          _
        // Predicated region
        $region41: #{tpu_custom_call.1} parent=31 // pred_check
          %p198 = pneg %p84
        $region42: #{tpu_custom_call.1} parent=31 // pred_check_branch
          %200 = sbr.rel (%p198) target = $region44
        $region43: #{tpu_custom_call.1} parent=31 // pred_region
          %202 = dma.done [#allocation6], 512
        $region44: #{tpu_custom_call.1} parent=31 // pred_fallthru
          _
        %s203 = sand.u32 %s29, 1
        %s204 = scalar_lea.sflag [#allocation3], %s203
        %s205 = sand.u32 %s29, 1
        %s206 = smul.addr %s205, 8
        %s207 = scalar_lea.vmem [#allocation2], %s206
        %p208 = pneg %p42
        %p209 = pneg %p39
        %p210 = pneg %p63
        %p211 = pneg %p60
        %p212 = pneg %p84
        %p213 = pneg %p81
        %p214 = pneg %p110
        %p215 = pneg %p107
        %s216 = sand.u32 %s97, 1
        %s217 = scalar_lea.sflag [#allocation4], %s216
        %s218 = sand.u32 %s97, 1
        %s219 = smul.addr %s218, 8
        %s220 = scalar_lea.vmem [#allocation8], %s219
        %v221 = vld [vmem:[%s187] sm:$0xff]
        %v222 = vld [vmem:[#allocation5] sm:$0xff]
        %v223 = vld [vmem:[#allocation5 + $0x8] sm:$0xff]
        %v224 = vld [vmem:[#allocation5 + $0x10] sm:$0xff]
        %v225 = vld [vmem:[#allocation5 + $0x18] sm:$0xff]
        %vm226 = vcmask 261120
        %v228 = vsel %vm226, %v221, 0
        %230 = vmatpush.msra.mxu0 0.0
        %231 = vmatpush.msra.mxu0 0.0
        %232 = vmatpush.msra.mxu0 0.0
        %233 = vmatpush.msra.mxu0 0.0
        %234 = vmatpush.msra.mxu0 0.0
        %235 = vmatpush.msra.mxu0 0.0
        %236 = vmatpush.msra.mxu0 0.0
        %237 = vmatpush.msra.mxu0 0.0
        %238 = vmatpush.msra.mxu0 0.0
        %239 = vmatpush.msra.mxu0 0.0
        %240 = vmatpush.msra.mxu0 0.0
        %241 = vmatpush.msra.mxu0 0.0
        %242 = vmatpush.msra.mxu0 %v225
        %243 = vmatpush.msra.mxu0 %v224
        %244 = vmatpush.msra.mxu0 %v223
        %245 = vmatpush.msra.mxu0 %v222
        %246 = vmatmul.f32.gmra.mxu0 %v228
        %v247 = vpop.f32.mrf.mxu0
        %v248 = vadd.f32 0.0, %v247
        %249 = vdwg.mxu0
        %251 = vrot.lane.b32.xlu0 %v248, 96
        %v252 = vpop.permute.xlu0 %251
        %vm253 = vcmask 64512
        %v254 = vsel %vm253, %v248, 0
        %v256 = vsel %vm253, %v252, 0
        %258 = vmatpush.xpose.msra.mxu0 0.0
        %259 = vmatpush.xpose.msra.mxu0 0.0
        %260 = vmatpush.xpose.msra.mxu0 0.0
        %261 = vmatpush.xpose.msra.mxu0 0.0
        %262 = vmatpush.xpose.msra.mxu0 0.0
        %263 = vmatpush.xpose.msra.mxu0 0.0
        %264 = vmatpush.xpose.msra.mxu0 0.0
        %265 = vmatpush.xpose.msra.mxu0 0.0
        %266 = vmatpush.xpose.msra.mxu0 0.0
        %267 = vmatpush.xpose.msra.mxu0 0.0
        %268 = vmatpush.xpose.msra.mxu0 0.0
        %269 = vmatpush.xpose.msra.mxu0 0.0
        %270 = vmatpush.xpose.msra.mxu0 0.0
        %271 = vmatpush.xpose.msra.mxu0 0.0
        %272 = vmatpush.xpose.msra.mxu0 0.0
        %273 = vmatpush.xpose.msra.mxu0 %v256
        %274 = vmatmul.f32.gmra.mxu0 %v254
        %v275 = vpop.f32.mrf.mxu0
        %v276 = vadd.f32 0.0, %v275
        %277 = vdwg.mxu0
        %v278 = vsel %vm253, %v276, -inf
        %279 = vmax.xlane.f32.xlu0 %v278
        %v280 = vpop.xlane.xlu0 %279
        %v281 = vsub.f32 %v276, %v280
        %v282 = vmul.f32 %v281, 1.442695
        %v283 = vpow.pop %v282
        %v284 = vsel %vm253, %v283, 0.0
        %285 = vadd.xlane.f32.xlu0 %v284
        %v286 = vpop.xlane.xlu0 %285
        %v287 = vrcp.pop %v286
        %v288 = vmul.f32 %v283, %v287
        %289 = vrot.lane.b32.xlu0 %v248, 64
        %v290 = vpop.permute.xlu0 %289
        %v293 = vsel %vm253, %v288, 0
        %295 = vmatpush.msra.mxu0 0.0
        %296 = vmatpush.msra.mxu0 0.0
        %297 = vmatpush.msra.mxu0 0.0
        %298 = vmatpush.msra.mxu0 0.0
        %299 = vmatpush.msra.mxu0 0.0
        %300 = vmatpush.msra.mxu0 0.0
        %301 = vmatpush.msra.mxu0 0.0
        %302 = vmatpush.msra.mxu0 0.0
        %303 = vmatpush.msra.mxu0 0.0
        %304 = vmatpush.msra.mxu0 0.0
        %305 = vmatpush.msra.mxu0 0.0
        %306 = vmatpush.msra.mxu0 0.0
        %307 = vmatpush.msra.mxu0 0.0
        %308 = vmatpush.msra.mxu0 0.0
        %309 = vmatpush.msra.mxu0 0.0
        %310 = vmatpush.msra.mxu0 %v290
        %311 = vmatmul.f32.gmra.mxu0 %v293
        %v312 = vpop.f32.mrf.mxu0
        %v313 = vadd.f32 0.0, %v312
        %314 = vdwg.mxu0
        %315 = vrot.lane.b32.xlu0 %v248, 120
        %v316 = vpop.permute.xlu0 %315
        %317 = vrot.lane.b32.xlu0 %v248, 88
        %v318 = vpop.permute.xlu0 %317
        %v319 = vsel %vm253, %v316, 0
        %v321 = vsel %vm253, %v318, 0
        %323 = vmatpush.xpose.msra.mxu0 0.0
        %324 = vmatpush.xpose.msra.mxu0 0.0
        %325 = vmatpush.xpose.msra.mxu0 0.0
        %326 = vmatpush.xpose.msra.mxu0 0.0
        %327 = vmatpush.xpose.msra.mxu0 0.0
        %328 = vmatpush.xpose.msra.mxu0 0.0
        %329 = vmatpush.xpose.msra.mxu0 0.0
        %330 = vmatpush.xpose.msra.mxu0 0.0
        %331 = vmatpush.xpose.msra.mxu0 0.0
        %332 = vmatpush.xpose.msra.mxu0 0.0
        %333 = vmatpush.xpose.msra.mxu0 0.0
        %334 = vmatpush.xpose.msra.mxu0 0.0
        %335 = vmatpush.xpose.msra.mxu0 0.0
        %336 = vmatpush.xpose.msra.mxu0 0.0
        %337 = vmatpush.xpose.msra.mxu0 0.0
        %338 = vmatpush.xpose.msra.mxu0 %v321
        %339 = vmatmul.f32.gmra.mxu0 %v319
        %v340 = vpop.f32.mrf.mxu0
        %v341 = vadd.f32 0.0, %v340
        %342 = vdwg.mxu0
        %v343 = vsel %vm253, %v341, -inf
        %344 = vmax.xlane.f32.xlu0 %v343
        %v345 = vpop.xlane.xlu0 %344
        %v346 = vsub.f32 %v341, %v345
        %v347 = vmul.f32 %v346, 1.442695
        %v348 = vpow.pop %v347
        %v349 = vsel %vm253, %v348, 0.0
        %350 = vadd.xlane.f32.xlu0 %v349
        %v351 = vpop.xlane.xlu0 %350
        %v352 = vrcp.pop %v351
        %v353 = vmul.f32 %v348, %v352
        %354 = vrot.lane.b32.xlu0 %v248, 56
        %v355 = vpop.permute.xlu0 %354
        %v358 = vsel %vm253, %v353, 0
        %360 = vmatpush.msra.mxu0 0.0
        %361 = vmatpush.msra.mxu0 0.0
        %362 = vmatpush.msra.mxu0 0.0
        %363 = vmatpush.msra.mxu0 0.0
        %364 = vmatpush.msra.mxu0 0.0
        %365 = vmatpush.msra.mxu0 0.0
        %366 = vmatpush.msra.mxu0 0.0
        %367 = vmatpush.msra.mxu0 0.0
        %368 = vmatpush.msra.mxu0 0.0
        %369 = vmatpush.msra.mxu0 0.0
        %370 = vmatpush.msra.mxu0 0.0
        %371 = vmatpush.msra.mxu0 0.0
        %372 = vmatpush.msra.mxu0 0.0
        %373 = vmatpush.msra.mxu0 0.0
        %374 = vmatpush.msra.mxu0 0.0
        %375 = vmatpush.msra.mxu0 %v355
        %376 = vmatmul.f32.gmra.mxu0 %v358
        %v377 = vpop.f32.mrf.mxu0
        %v378 = vadd.f32 0.0, %v377
        %379 = vdwg.mxu0
        %380 = vrot.lane.b32.xlu0 %v248, 112
        %v381 = vpop.permute.xlu0 %380
        %382 = vrot.lane.b32.xlu0 %v248, 80
        %v383 = vpop.permute.xlu0 %382
        %v384 = vsel %vm253, %v381, 0
        %v386 = vsel %vm253, %v383, 0
        %388 = vmatpush.xpose.msra.mxu0 0.0
        %389 = vmatpush.xpose.msra.mxu0 0.0
        %390 = vmatpush.xpose.msra.mxu0 0.0
        %391 = vmatpush.xpose.msra.mxu0 0.0
        %392 = vmatpush.xpose.msra.mxu0 0.0
        %393 = vmatpush.xpose.msra.mxu0 0.0
        %394 = vmatpush.xpose.msra.mxu0 0.0
        %395 = vmatpush.xpose.msra.mxu0 0.0
        %396 = vmatpush.xpose.msra.mxu0 0.0
        %397 = vmatpush.xpose.msra.mxu0 0.0
        %398 = vmatpush.xpose.msra.mxu0 0.0
        %399 = vmatpush.xpose.msra.mxu0 0.0
        %400 = vmatpush.xpose.msra.mxu0 0.0
        %401 = vmatpush.xpose.msra.mxu0 0.0
        %402 = vmatpush.xpose.msra.mxu0 0.0
        %403 = vmatpush.xpose.msra.mxu0 %v386
        %404 = vmatmul.f32.gmra.mxu0 %v384
        %v405 = vpop.f32.mrf.mxu0
        %v406 = vadd.f32 0.0, %v405
        %407 = vdwg.mxu0
        %v408 = vsel %vm253, %v406, -inf
        %409 = vmax.xlane.f32.xlu0 %v408
        %v410 = vpop.xlane.xlu0 %409
        %v411 = vsub.f32 %v406, %v410
        %v412 = vmul.f32 %v411, 1.442695
        %v413 = vpow.pop %v412
        %v414 = vsel %vm253, %v413, 0.0
        %415 = vadd.xlane.f32.xlu0 %v414
        %v416 = vpop.xlane.xlu0 %415
        %v417 = vrcp.pop %v416
        %v418 = vmul.f32 %v413, %v417
        %419 = vrot.lane.b32.xlu0 %v248, 48
        %v420 = vpop.permute.xlu0 %419
        %v423 = vsel %vm253, %v418, 0
        %425 = vmatpush.msra.mxu0 0.0
        %426 = vmatpush.msra.mxu0 0.0
        %427 = vmatpush.msra.mxu0 0.0
        %428 = vmatpush.msra.mxu0 0.0
        %429 = vmatpush.msra.mxu0 0.0
        %430 = vmatpush.msra.mxu0 0.0
        %431 = vmatpush.msra.mxu0 0.0
        %432 = vmatpush.msra.mxu0 0.0
        %433 = vmatpush.msra.mxu0 0.0
        %434 = vmatpush.msra.mxu0 0.0
        %435 = vmatpush.msra.mxu0 0.0
        %436 = vmatpush.msra.mxu0 0.0
        %437 = vmatpush.msra.mxu0 0.0
        %438 = vmatpush.msra.mxu0 0.0
        %439 = vmatpush.msra.mxu0 0.0
        %440 = vmatpush.msra.mxu0 %v420
        %441 = vmatmul.f32.gmra.mxu0 %v423
        %v442 = vpop.f32.mrf.mxu0
        %v443 = vadd.f32 0.0, %v442
        %444 = vdwg.mxu0
        %445 = vrot.lane.b32.xlu0 %v248, 104
        %v446 = vpop.permute.xlu0 %445
        %447 = vrot.lane.b32.xlu0 %v248, 72
        %v448 = vpop.permute.xlu0 %447
        %v449 = vsel %vm253, %v446, 0
        %v451 = vsel %vm253, %v448, 0
        %453 = vmatpush.xpose.msra.mxu0 0.0
        %454 = vmatpush.xpose.msra.mxu0 0.0
        %455 = vmatpush.xpose.msra.mxu0 0.0
        %456 = vmatpush.xpose.msra.mxu0 0.0
        %457 = vmatpush.xpose.msra.mxu0 0.0
        %458 = vmatpush.xpose.msra.mxu0 0.0
        %459 = vmatpush.xpose.msra.mxu0 0.0
        %460 = vmatpush.xpose.msra.mxu0 0.0
        %461 = vmatpush.xpose.msra.mxu0 0.0
        %462 = vmatpush.xpose.msra.mxu0 0.0
        %463 = vmatpush.xpose.msra.mxu0 0.0
        %464 = vmatpush.xpose.msra.mxu0 0.0
        %465 = vmatpush.xpose.msra.mxu0 0.0
        %466 = vmatpush.xpose.msra.mxu0 0.0
        %467 = vmatpush.xpose.msra.mxu0 0.0
        %468 = vmatpush.xpose.msra.mxu0 %v451
        %469 = vmatmul.f32.gmra.mxu0 %v449
        %v470 = vpop.f32.mrf.mxu0
        %v471 = vadd.f32 0.0, %v470
        %472 = vdwg.mxu0
        %v473 = vsel %vm253, %v471, -inf
        %474 = vmax.xlane.f32.xlu0 %v473
        %v475 = vpop.xlane.xlu0 %474
        %v476 = vsub.f32 %v471, %v475
        %v477 = vmul.f32 %v476, 1.442695
        %v478 = vpow.pop %v477
        %v479 = vsel %vm253, %v478, 0.0
        %480 = vadd.xlane.f32.xlu0 %v479
        %v481 = vpop.xlane.xlu0 %480
        %v482 = vrcp.pop %v481
        %v483 = vmul.f32 %v478, %v482
        %484 = vrot.lane.b32.xlu0 %v248, 40
        %v485 = vpop.permute.xlu0 %484
        %v488 = vsel %vm253, %v483, 0
        %490 = vmatpush.msra.mxu0 0.0
        %491 = vmatpush.msra.mxu0 0.0
        %492 = vmatpush.msra.mxu0 0.0
        %493 = vmatpush.msra.mxu0 0.0
        %494 = vmatpush.msra.mxu0 0.0
        %495 = vmatpush.msra.mxu0 0.0
        %496 = vmatpush.msra.mxu0 0.0
        %497 = vmatpush.msra.mxu0 0.0
        %498 = vmatpush.msra.mxu0 0.0
        %499 = vmatpush.msra.mxu0 0.0
        %500 = vmatpush.msra.mxu0 0.0
        %501 = vmatpush.msra.mxu0 0.0
        %502 = vmatpush.msra.mxu0 0.0
        %503 = vmatpush.msra.mxu0 0.0
        %504 = vmatpush.msra.mxu0 0.0
        %505 = vmatpush.msra.mxu0 %v485
        %506 = vmatmul.f32.gmra.mxu0 %v488
        %v507 = vpop.f32.mrf.mxu0
        %v508 = vadd.f32 0.0, %v507
        %509 = vdwg.mxu0
        %511 = vrot.lane.b32.xlu0 %v378, 8
        %v512 = vpop.permute.xlu0 %511
        %515 = vrot.lane.b32.xlu0 %v443, 16
        %v516 = vpop.permute.xlu0 %515
        %519 = vrot.lane.b32.xlu0 %v508, 24
        %v520 = vpop.permute.xlu0 %519
        %v522 = vsel %vm253, %v313, %v512
        %vm523 = vcmask 130048
        %v524 = vsel %vm523, %v522, %v516
        %vm525 = vcmask 195584
        %v526 = vsel %vm525, %v524, %v520
        %v527 = vld [vmem:[#allocation7] sm:$0xff]
        %v528 = vld [vmem:[#allocation7 + $0x8] sm:$0xff]
        %v529 = vld [vmem:[#allocation7 + $0x10] sm:$0xff]
        %v530 = vld [vmem:[#allocation7 + $0x18] sm:$0xff]
        %v532 = vsel %vm226, %v526, 0
        %534 = vmatpush.msra.mxu0 0.0
        %535 = vmatpush.msra.mxu0 0.0
        %536 = vmatpush.msra.mxu0 0.0
        %537 = vmatpush.msra.mxu0 0.0
        %538 = vmatpush.msra.mxu0 0.0
        %539 = vmatpush.msra.mxu0 0.0
        %540 = vmatpush.msra.mxu0 0.0
        %541 = vmatpush.msra.mxu0 0.0
        %542 = vmatpush.msra.mxu0 0.0
        %543 = vmatpush.msra.mxu0 0.0
        %544 = vmatpush.msra.mxu0 0.0
        %545 = vmatpush.msra.mxu0 0.0
        %546 = vmatpush.msra.mxu0 %v530
        %547 = vmatpush.msra.mxu0 %v529
        %548 = vmatpush.msra.mxu0 %v528
        %549 = vmatpush.msra.mxu0 %v527
        %550 = vmatmul.f32.gmra.mxu0 %v532
        %v551 = vpop.f32.mrf.mxu0
        %v552 = vadd.f32 0.0, %v551
        %553 = vdwg.mxu0
        %554 = vst.msk [vmem:[%s220] sm:$0xff] %vm226, %v552
        %s555 = sand.u32 %s97, 1
        %s556 = scalar_lea.sflag [#allocation4], %s555
        %s557 = sand.u32 %s97, 1
        %s558 = smul.addr %s557, 8
        %s559 = scalar_lea.vmem [#allocation8], %s558
        // Predicated region
        $region45: #{tpu_custom_call.1} parent=31 // pred_check
          %p560 = pneg %p107
        $region46: #{tpu_custom_call.1} parent=31 // pred_check_branch
          %562 = sbr.rel (%p560) target = $region48
        $region47: #{tpu_custom_call.1} parent=31 // pred_region
          %564 = vsyncadd %s556, 0
          %s565 = smul.addr %s21, 8
          %s566 = scalar_lea.hbm %s3, %s565
          %s568 = sshll.u32 %s559, 4
          %s569 = int_to_ptr.vmem [resolvable:$true] %s568
          %s570 = sshll.u32 %s566, 4
          %s571 = int_to_ptr.hbm [resolvable:$true] %s570
          %573 = dma.vmem_to_hbm [thread:$0]  %s569, 128, %s571, %s556
        $region48: #{tpu_custom_call.1} parent=31 // pred_fallthru
          _
      $region32: #{tpu_custom_call.1} parent=5 // pred_fallthru
        _
      %p574 = scmp.le.s32.totalorder 2, %s16
      // Predicated region
      $region49: #{tpu_custom_call.1} parent=5 // pred_check
        %p575 = pneg %p574
      $region50: #{tpu_custom_call.1} parent=5 // pred_check_branch
        %577 = sbr.rel (%p575) target = $region52
      $region51: #{tpu_custom_call.1} parent=5 // pred_region
        %s578 = ssub.s32 %s16, 2
        // Predicated region
        $region53: #{tpu_custom_call.1} parent=51 // pred_check
          %p579 = pneg %p113
        $region54: #{tpu_custom_call.1} parent=51 // pred_check_branch
          %581 = sbr.rel (%p579) target = $region56
        $region55: #{tpu_custom_call.1} parent=51 // pred_region
          %s582 = sand.u32 %s98, 1
          %s583 = scalar_lea.sflag [#allocation4], %s582
          %s584 = sand.u32 %s98, 1
          %s585 = smul.addr %s584, 8
          %s586 = scalar_lea.vmem [#allocation8], %s585
          %588 = dma.done %s583, 128
        $region56: #{tpu_custom_call.1} parent=51 // pred_fallthru
          _
      $region52: #{tpu_custom_call.1} parent=5 // pred_fallthru
        _
    $region6: #{tpu_custom_call.1} parent=1 // loop_footer
      %s20 = sadd.s32 1, %s16
    $region7: #{tpu_custom_call.1} parent=1 // loop_footer_branch
      %15 = sbr.rel target = $region3
    $region8: #{tpu_custom_call.1} parent=1 // loop_exit
      _
    %589 = vsyncpa [#allocation3], 1
    %s590 = scalar_lea.sflag [#allocation3], 1
    %591 = vsyncpa %s590, 1
    %592 = vsyncpa [#allocation6], 1
    %593 = vsyncpa [#allocation4], 1
    %s594 = scalar_lea.sflag [#allocation4], 1
    %595 = vsyncpa %s594, 1

</llo_original>
